<compile_context>
chip_gen: v5e
topology: v5e:2x2
jax: 0.10.0
libtpu: 0.0.40
codegen_flags: <defaults>
</compile_context>

<pallas_src>
import jax
import jax.numpy as jnp
from jax import lax
from jax.experimental import pallas as pl
from jax.experimental.pallas import tpu as pltpu


_SQRT_HALF = 0.7071067811865476


def _erf_approx(z):
    """erf via Abramowitz & Stegun 7.1.26 (max abs err ~1.5e-7).

    Uses only exp / mul / add / where / EUP-reciprocal, all of which lower in
    Mosaic.
    """
    a1, a2, a3, a4, a5 = (0.254829592, -0.284496736, 1.421413741,
                          -1.453152027, 1.061405429)
    p = 0.3275911
    s = jnp.where(z >= 0.0, 1.0, -1.0)
    za = jnp.abs(z)
    # Divide on the EUP slot (idle next to the exp) instead of the VALU.
    t = pl.reciprocal(1.0 + p * za, approx=True)
    poly = ((((a5 * t + a4) * t + a3) * t + a2) * t + a1) * t
    return s * (1.0 - poly * jnp.exp(-za * za))


def _gelu_exact(x):
    # torch.nn.GELU() default (approximate='none'): 0.5 * x * (1 + erf(x/sqrt(2)))
    return 0.5 * x * (1.0 + _erf_approx(x * _SQRT_HALF))


def _baseblock_kernel(m_ref, b_ref, x_ref, o_ref):
    """Folded channel mix + bias + exact GELU on one (batch, pixel-slab) block.

    m_ref : (nc, nc) SMEM          folded affine matrix M = W4 W3 W2 W1
    b_ref : (nc,)    SMEM          folded bias
    x_ref : (bb, nc, ts, 128) VMEM pixels packed onto (sublane, lane)
    o_ref : (bb, nc, ts, 128) VMEM
    """
    nc = x_ref.shape[1]
    # Load each channel slab once; each is a lane-dense, (8,128)-tileable slab.
    xs = [x_ref[:, k] for k in range(nc)]            # (bb, ts, 128) each
    for c in range(nc):
        acc = xs[0] * m_ref[c, 0]
        for k in range(1, nc):
            acc = acc + xs[k] * m_ref[c, k]
        o_ref[:, c] = _gelu_exact(acc + b_ref[c]).astype(o_ref.dtype)


def _grouped_1x1_to_dense(w, groups):
    """PyTorch grouped 1x1 conv weight (O, I//g, 1, 1) -> dense (O, I) matrix."""
    out_ch, in_per_group = w.shape[0], w.shape[1]
    in_ch = in_per_group * groups
    out_per_group = out_ch // groups
    w2 = w[:, :, 0, 0]                                                 # (O, I//g)
    rows = jnp.arange(out_ch)
    cols = (rows // out_per_group)[:, None] * in_per_group + \
        jnp.arange(in_per_group)[None, :]
    dense = jnp.zeros((out_ch, in_ch), dtype=w.dtype)
    return dense.at[rows[:, None], cols].set(w2)


def fold_baseblock_params(params, *, nc, f):
    """One-time prep: fold the four 1x1 convs into a single affine (M, b)."""
    (w1, b1), (w2, b2), (w3, b3), (w4, b4) = params
    m1 = _grouped_1x1_to_dense(w1, f).astype(jnp.float32)    # (f, nc)
    m2 = w2[:, :, 0, 0].astype(jnp.float32)                  # (f, f)
    m3 = _grouped_1x1_to_dense(w3, f).astype(jnp.float32)    # (nc, f)
    m4 = w4[:, :, 0, 0].astype(jnp.float32)                  # (nc, nc)
    M = m4 @ (m3 @ (m2 @ m1))                                # (nc, nc)
    b = m4 @ (m3 @ (m2 @ b1.astype(jnp.float32) +
                    b2.astype(jnp.float32)) +
              b3.astype(jnp.float32)) + b4.astype(jnp.float32)
    return M, b


def _vmem_capacity_bytes():
    try:
        return int(pltpu.get_tpu_info().vmem_capacity_bytes)
    except Exception:
        return 64 * 1024 * 1024     # conservative floor (v7x per-TensorCore)


def _plan_tiling(B, P, nc, itemsize=4):
    """Pick (batch_block bb, sublane rows per block ts, padded rows, vmem_limit)."""
    vmem_cap = _vmem_capacity_bytes()
    s_raw = -(-P // 128)                         # 128-pixel rows needed
    row_bytes = nc * 128 * itemsize              # one pixel-row, all channels, one image
    # Double-buffered (in + out) blocks must stay well inside VMEM.
    vmem_rows = max(8, (vmem_cap // 2) // (4 * row_bytes))
    # ~2 MiB per input block already sits at the HBM roofline sweet spot.
    target_rows = max(8, (2 * 1024 * 1024) // row_bytes)
    cap_rows = max(8, (min(vmem_rows, target_rows) // 8) * 8)

    if s_raw <= cap_rows:
        ts = s_raw
        if B == 1 and s_raw >= 16:
            ts = -(-s_raw // 16) * 8             # >=2 pixel steps: feed both v7x TCs
    else:
        ts = cap_rows
    s_pad = -(-s_raw // ts) * ts
    n_s = s_pad // ts

    bb = 1
    if n_s == 1:
        # Many-small-images case: pack several images per grid step, but keep
        # >= 2 grid steps when B allows it (v7x megacore) and respect the caps.
        for cand in range(1, B + 1):
            if B % cand:
                continue
            if B >= 2 and (B // cand) < 2:
                break
            if cand * ts > cap_rows:
                break
            bb = cand

    block_bytes = bb * nc * ts * 128 * itemsize
    vmem_limit = int(min(max(4 * block_bytes + (2 << 20), 32 * 1024 * 1024),
                         0.9 * vmem_cap))
    return bb, ts, s_pad, vmem_limit


def baseblock_forward(x, params, *, nc, f):
    """x: (B, nc, H, W) f32 NCHW. params: ((w1,b1),(w2,b2),(w3,b3),(w4,b4)) in
    PyTorch OIHW layout. Returns (B, nc, H, W) f32 = Baseblock(nc, f)(x)."""
    B, C, H, W = x.shape
    assert C == nc
    P = H * W

    # Tiny one-time weight prep: grouped->dense expansion + affine fold.
    M, bvec = fold_baseblock_params(params, nc=nc, f=f)

    bb, ts, s_pad, vmem_limit = _plan_tiling(B, P, nc)
    p_pad = s_pad * 128

    # Pixels onto (sublane, lane): (B, nc, P) -> (B, nc, s_pad, 128).
    x_flat = x.reshape(B, nc, P)
    if p_pad != P:
        x_flat = jnp.pad(x_flat, ((0, 0), (0, 0), (0, p_pad - P)))
    x_rows = x_flat.reshape(B, nc, s_pad, 128)

    grid = (B // bb, s_pad // ts)
    blk = (bb, nc, ts, 128)

    out = pl.pallas_call(
        _baseblock_kernel,
        out_shape=jax.ShapeDtypeStruct((B, nc, s_pad, 128), jnp.float32),
        grid_spec=pltpu.PrefetchScalarGridSpec(
            num_scalar_prefetch=0,
            grid=grid,
            in_specs=[
                pl.BlockSpec(memory_space=pltpu.MemorySpace.SMEM),   # M (nc, nc)
                pl.BlockSpec(memory_space=pltpu.MemorySpace.SMEM),   # b (nc,)
                pl.BlockSpec(blk, lambda i, s: (i, 0, s, 0)),
            ],
            out_specs=pl.BlockSpec(blk, lambda i, s: (i, 0, s, 0)),
        ),
        compiler_params=pltpu.CompilerParams(
            # both axes fully independent -> megacore-shardable on v7x
            dimension_semantics=("parallel", "parallel"),
            vmem_limit_bytes=vmem_limit,
        ),
    )(M, bvec, x_rows)

    return out.reshape(B, nc, p_pad)[:, :, :P].reshape(B, nc, H, W)


def _reference(x, params, *, nc, f):
    """Pure-JAX reference mirroring the PyTorch module (lax grouped convs)."""
    (w1, b1), (w2, b2), (w3, b3), (w4, b4) = params
    dn = ("NCHW", "OIHW", "NCHW")
    y = lax.conv_general_dilated(x, w1, (1, 1), "VALID", dimension_numbers=dn,
                                 feature_group_count=f) + b1[None, :, None, None]
    y = lax.conv_general_dilated(y, w2, (1, 1), "VALID",
                                 dimension_numbers=dn) + b2[None, :, None, None]
    y = lax.conv_general_dilated(y, w3, (1, 1), "VALID", dimension_numbers=dn,
                                 feature_group_count=f) + b3[None, :, None, None]
    y = lax.conv_general_dilated(y, w4, (1, 1), "VALID",
                                 dimension_numbers=dn) + b4[None, :, None, None]
    return jax.nn.gelu(y, approximate=False)


if __name__ == "__main__":
    # Baseblock(nc=4, f=2) with default kernel_size=1, stride=1
    nc, f = 4, 2
    B, H, W = 2, 16, 16

    key = jax.random.PRNGKey(0)
    kx, k1, k2, k3, k4, kb1, kb2, kb3, kb4 = jax.random.split(key, 9)
    x = jax.random.normal(kx, (B, nc, H, W), dtype=jnp.float32)

    # PyTorch Conv2d weight layouts (OIHW):
    w1 = 0.3 * jax.random.normal(k1, (f, nc // f, 1, 1), jnp.float32)  # Conv2d(nc,f,1,groups=f)
    b1 = 0.1 * jax.random.normal(kb1, (f,), jnp.float32)
    w2 = 0.3 * jax.random.normal(k2, (f, f, 1, 1), jnp.float32)        # Conv2d(f,f,1)
    b2 = 0.1 * jax.random.normal(kb2, (f,), jnp.float32)
    w3 = 0.3 * jax.random.normal(k3, (nc, 1, 1, 1), jnp.float32)       # Conv2d(f,nc,1,groups=f)
    b3 = 0.1 * jax.random.normal(kb3, (nc,), jnp.float32)
    w4 = 0.3 * jax.random.normal(k4, (nc, nc, 1, 1), jnp.float32)      # Conv2d(nc,nc,1)
    b4 = 0.1 * jax.random.normal(kb4, (nc,), jnp.float32)

    params = ((w1, b1), (w2, b2), (w3, b3), (w4, b4))

    # jit the wrapper so the tiny weight-prep ops fuse into one dispatch.
    fwd = jax.jit(lambda xx, pp: baseblock_forward(xx, pp, nc=nc, f=f))
    out = jax.block_until_ready(fwd(x, params))

    ref = _reference(x, params, nc=nc, f=f)
    assert out.shape == (B, nc, H, W), out.shape
    max_err = float(jnp.max(jnp.abs(out - ref)))
    assert jnp.allclose(out, ref, atol=2e-3, rtol=2e-3), f"mismatch, max_err={max_err}"

    print("KERNEL_OK")
</pallas_src>

<mosaic_0001>
module attributes {stable_mosaic.version = 11 : i64} {
  func.func @_baseblock_kernel(%arg0: i32, %arg1: i32, %arg2: memref<4x4xf32, #tpu.memory_space<smem>>, %arg3: memref<4xf32, #tpu.memory_space<smem>>, %arg4: memref<1x4x2x128xf32, #tpu.memory_space<vmem>>, %arg5: memref<1x4x2x128xf32, #tpu.memory_space<vmem>>) attributes {dimension_semantics = [#tpu.dimension_semantics<parallel>, #tpu.dimension_semantics<parallel>], iteration_bounds = array<i64: 2, 1>, scalar_prefetch = 0 : i64, scratch_operands = 0 : i64, tpu.core_type = #tpu.core_type<tc>, window_params = [{transform_indices = @transform_0, window_bounds = array<i64: 4, 4>}, {transform_indices = @transform_1, window_bounds = array<i64: 4>}, {transform_indices = @transform_2, window_bounds = array<i64: 1, 4, 2, 128>}, {transform_indices = @transform_3, window_bounds = array<i64: 1, 4, 2, 128>}]} {
    %c0 = arith.constant 0 : index
    %c0_0 = arith.constant 0 : index
    %c0_1 = arith.constant 0 : index
    %c0_2 = arith.constant 0 : index
    %0 = vector.load %arg4[%c0, %c0_0, %c0_1, %c0_2] : memref<1x4x2x128xf32, #tpu.memory_space<vmem>>, vector<1x1x2x128xf32>
    %1 = vector.shape_cast %0 : vector<1x1x2x128xf32> to vector<1x2x128xf32>
    %c0_3 = arith.constant 0 : index
    %c1 = arith.constant 1 : index
    %c0_4 = arith.constant 0 : index
    %c0_5 = arith.constant 0 : index
    %2 = vector.load %arg4[%c0_3, %c1, %c0_4, %c0_5] : memref<1x4x2x128xf32, #tpu.memory_space<vmem>>, vector<1x1x2x128xf32>
    %3 = vector.shape_cast %2 : vector<1x1x2x128xf32> to vector<1x2x128xf32>
    %c0_6 = arith.constant 0 : index
    %c2 = arith.constant 2 : index
    %c0_7 = arith.constant 0 : index
    %c0_8 = arith.constant 0 : index
    %4 = vector.load %arg4[%c0_6, %c2, %c0_7, %c0_8] : memref<1x4x2x128xf32, #tpu.memory_space<vmem>>, vector<1x1x2x128xf32>
    %5 = vector.shape_cast %4 : vector<1x1x2x128xf32> to vector<1x2x128xf32>
    %c0_9 = arith.constant 0 : index
    %c3 = arith.constant 3 : index
    %c0_10 = arith.constant 0 : index
    %c0_11 = arith.constant 0 : index
    %6 = vector.load %arg4[%c0_9, %c3, %c0_10, %c0_11] : memref<1x4x2x128xf32, #tpu.memory_space<vmem>>, vector<1x1x2x128xf32>
    %7 = vector.shape_cast %6 : vector<1x1x2x128xf32> to vector<1x2x128xf32>
    %c0_12 = arith.constant 0 : index
    %c0_13 = arith.constant 0 : index
    %8 = memref.load %arg2[%c0_12, %c0_13] : memref<4x4xf32, #tpu.memory_space<smem>>
    %9 = vector.broadcast %8 : f32 to vector<1x2x128xf32>
    %10 = arith.mulf %1, %9 : vector<1x2x128xf32>
    %c0_14 = arith.constant 0 : index
    %c1_15 = arith.constant 1 : index
    %11 = memref.load %arg2[%c0_14, %c1_15] : memref<4x4xf32, #tpu.memory_space<smem>>
    %12 = vector.broadcast %11 : f32 to vector<1x2x128xf32>
    %13 = arith.mulf %3, %12 : vector<1x2x128xf32>
    %14 = arith.addf %10, %13 : vector<1x2x128xf32>
    %c0_16 = arith.constant 0 : index
    %c2_17 = arith.constant 2 : index
    %15 = memref.load %arg2[%c0_16, %c2_17] : memref<4x4xf32, #tpu.memory_space<smem>>
    %16 = vector.broadcast %15 : f32 to vector<1x2x128xf32>
    %17 = arith.mulf %5, %16 : vector<1x2x128xf32>
    %18 = arith.addf %14, %17 : vector<1x2x128xf32>
    %c0_18 = arith.constant 0 : index
    %c3_19 = arith.constant 3 : index
    %19 = memref.load %arg2[%c0_18, %c3_19] : memref<4x4xf32, #tpu.memory_space<smem>>
    %20 = vector.broadcast %19 : f32 to vector<1x2x128xf32>
    %21 = arith.mulf %7, %20 : vector<1x2x128xf32>
    %22 = arith.addf %18, %21 : vector<1x2x128xf32>
    %c0_20 = arith.constant 0 : index
    %23 = memref.load %arg3[%c0_20] : memref<4xf32, #tpu.memory_space<smem>>
    %24 = vector.broadcast %23 : f32 to vector<1x2x128xf32>
    %25 = arith.addf %22, %24 : vector<1x2x128xf32>
    %cst = arith.constant 5.000000e-01 : f32
    %26 = vector.broadcast %cst : f32 to vector<1x2x128xf32>
    %27 = arith.mulf %26, %25 : vector<1x2x128xf32>
    %cst_21 = arith.constant 0.707106769 : f32
    %28 = vector.broadcast %cst_21 : f32 to vector<1x2x128xf32>
    %29 = arith.mulf %25, %28 : vector<1x2x128xf32>
    %cst_22 = arith.constant 0.000000e+00 : f32
    %30 = vector.broadcast %cst_22 : f32 to vector<1x2x128xf32>
    %31 = arith.cmpf oge, %29, %30 : vector<1x2x128xf32>
    %cst_23 = arith.constant 1.000000e+00 : f32
    %cst_24 = arith.constant -1.000000e+00 : f32
    %32 = vector.broadcast %cst_23 : f32 to vector<1x2x128xf32>
    %33 = vector.broadcast %cst_24 : f32 to vector<1x2x128xf32>
    %34 = arith.select %31, %32, %33 : vector<1x2x128xi1>, vector<1x2x128xf32>
    %35 = math.absf %29 : vector<1x2x128xf32>
    %cst_25 = arith.constant 0.327591091 : f32
    %36 = vector.broadcast %cst_25 : f32 to vector<1x2x128xf32>
    %37 = arith.mulf %36, %35 : vector<1x2x128xf32>
    %cst_26 = arith.constant 1.000000e+00 : f32
    %38 = vector.broadcast %cst_26 : f32 to vector<1x2x128xf32>
    %39 = arith.addf %38, %37 : vector<1x2x128xf32>
    %40 = tpu.reciprocal %39 {approx = true} : vector<1x2x128xf32> -> vector<1x2x128xf32>
    %cst_27 = arith.constant 1.06140542 : f32
    %41 = vector.broadcast %cst_27 : f32 to vector<1x2x128xf32>
    %42 = arith.mulf %41, %40 : vector<1x2x128xf32>
    %cst_28 = arith.constant -1.45315206 : f32
    %43 = vector.broadcast %cst_28 : f32 to vector<1x2x128xf32>
    %44 = arith.addf %42, %43 : vector<1x2x128xf32>
    %45 = arith.mulf %44, %40 : vector<1x2x128xf32>
    %cst_29 = arith.constant 1.42141378 : f32
    %46 = vector.broadcast %cst_29 : f32 to vector<1x2x128xf32>
    %47 = arith.addf %45, %46 : vector<1x2x128xf32>
    %48 = arith.mulf %47, %40 : vector<1x2x128xf32>
    %cst_30 = arith.constant -0.284496725 : f32
    %49 = vector.broadcast %cst_30 : f32 to vector<1x2x128xf32>
    %50 = arith.addf %48, %49 : vector<1x2x128xf32>
    %51 = arith.mulf %50, %40 : vector<1x2x128xf32>
    %cst_31 = arith.constant 0.254829586 : f32
    %52 = vector.broadcast %cst_31 : f32 to vector<1x2x128xf32>
    %53 = arith.addf %51, %52 : vector<1x2x128xf32>
    %54 = arith.mulf %53, %40 : vector<1x2x128xf32>
    %cst_32 = arith.constant 0.000000e+00 : f32
    %55 = vector.broadcast %cst_32 : f32 to vector<1x2x128xf32>
    %56 = arith.subf %55, %35 : vector<1x2x128xf32>
    %57 = arith.mulf %56, %35 : vector<1x2x128xf32>
    %58 = math.exp %57 : vector<1x2x128xf32>
    %59 = arith.mulf %54, %58 : vector<1x2x128xf32>
    %cst_33 = arith.constant 1.000000e+00 : f32
    %60 = vector.broadcast %cst_33 : f32 to vector<1x2x128xf32>
    %61 = arith.subf %60, %59 : vector<1x2x128xf32>
    %62 = arith.mulf %34, %61 : vector<1x2x128xf32>
    %cst_34 = arith.constant 1.000000e+00 : f32
    %63 = vector.broadcast %cst_34 : f32 to vector<1x2x128xf32>
    %64 = arith.addf %63, %62 : vector<1x2x128xf32>
    %65 = arith.mulf %27, %64 : vector<1x2x128xf32>
    %c0_35 = arith.constant 0 : index
    %c0_36 = arith.constant 0 : index
    %c0_37 = arith.constant 0 : index
    %c0_38 = arith.constant 0 : index
    %66 = vector.load %arg5[%c0_35, %c0_36, %c0_37, %c0_38] : memref<1x4x2x128xf32, #tpu.memory_space<vmem>>, vector<1x1x2x128xf32>
    %67 = vector.shape_cast %66 : vector<1x1x2x128xf32> to vector<1x2x128xf32>
    %68 = vector.shape_cast %65 : vector<1x2x128xf32> to vector<1x1x2x128xf32>
    tpu.vector_store %arg5[%c0_35, %c0_36, %c0_37, %c0_38], %68 {strides = array<i32>} : memref<1x4x2x128xf32, #tpu.memory_space<vmem>>, vector<1x1x2x128xf32>,
    %c1_39 = arith.constant 1 : index
    %c0_40 = arith.constant 0 : index
    %69 = memref.load %arg2[%c1_39, %c0_40] : memref<4x4xf32, #tpu.memory_space<smem>>
    %70 = vector.broadcast %69 : f32 to vector<1x2x128xf32>
    %71 = arith.mulf %1, %70 : vector<1x2x128xf32>
    %c1_41 = arith.constant 1 : index
    %c1_42 = arith.constant 1 : index
    %72 = memref.load %arg2[%c1_41, %c1_42] : memref<4x4xf32, #tpu.memory_space<smem>>
    %73 = vector.broadcast %72 : f32 to vector<1x2x128xf32>
    %74 = arith.mulf %3, %73 : vector<1x2x128xf32>
    %75 = arith.addf %71, %74 : vector<1x2x128xf32>
    %c1_43 = arith.constant 1 : index
    %c2_44 = arith.constant 2 : index
    %76 = memref.load %arg2[%c1_43, %c2_44] : memref<4x4xf32, #tpu.memory_space<smem>>
    %77 = vector.broadcast %76 : f32 to vector<1x2x128xf32>
    %78 = arith.mulf %5, %77 : vector<1x2x128xf32>
    %79 = arith.addf %75, %78 : vector<1x2x128xf32>
    %c1_45 = arith.constant 1 : index
    %c3_46 = arith.constant 3 : index
    %80 = memref.load %arg2[%c1_45, %c3_46] : memref<4x4xf32, #tpu.memory_space<smem>>
    %81 = vector.broadcast %80 : f32 to vector<1x2x128xf32>
    %82 = arith.mulf %7, %81 : vector<1x2x128xf32>
    %83 = arith.addf %79, %82 : vector<1x2x128xf32>
    %c1_47 = arith.constant 1 : index
    %84 = memref.load %arg3[%c1_47] : memref<4xf32, #tpu.memory_space<smem>>
    %85 = vector.broadcast %84 : f32 to vector<1x2x128xf32>
    %86 = arith.addf %83, %85 : vector<1x2x128xf32>
    %cst_48 = arith.constant 5.000000e-01 : f32
    %87 = vector.broadcast %cst_48 : f32 to vector<1x2x128xf32>
    %88 = arith.mulf %87, %86 : vector<1x2x128xf32>
    %cst_49 = arith.constant 0.707106769 : f32
    %89 = vector.broadcast %cst_49 : f32 to vector<1x2x128xf32>
    %90 = arith.mulf %86, %89 : vector<1x2x128xf32>
    %cst_50 = arith.constant 0.000000e+00 : f32
    %91 = vector.broadcast %cst_50 : f32 to vector<1x2x128xf32>
    %92 = arith.cmpf oge, %90, %91 : vector<1x2x128xf32>
    %cst_51 = arith.constant 1.000000e+00 : f32
    %cst_52 = arith.constant -1.000000e+00 : f32
    %93 = vector.broadcast %cst_51 : f32 to vector<1x2x128xf32>
    %94 = vector.broadcast %cst_52 : f32 to vector<1x2x128xf32>
    %95 = arith.select %92, %93, %94 : vector<1x2x128xi1>, vector<1x2x128xf32>
    %96 = math.absf %90 : vector<1x2x128xf32>
    %cst_53 = arith.constant 0.327591091 : f32
    %97 = vector.broadcast %cst_53 : f32 to vector<1x2x128xf32>
    %98 = arith.mulf %97, %96 : vector<1x2x128xf32>
    %cst_54 = arith.constant 1.000000e+00 : f32
    %99 = vector.broadcast %cst_54 : f32 to vector<1x2x128xf32>
    %100 = arith.addf %99, %98 : vector<1x2x128xf32>
    %101 = tpu.reciprocal %100 {approx = true} : vector<1x2x128xf32> -> vector<1x2x128xf32>
    %cst_55 = arith.constant 1.06140542 : f32
    %102 = vector.broadcast %cst_55 : f32 to vector<1x2x128xf32>
    %103 = arith.mulf %102, %101 : vector<1x2x128xf32>
    %cst_56 = arith.constant -1.45315206 : f32
    %104 = vector.broadcast %cst_56 : f32 to vector<1x2x128xf32>
    %105 = arith.addf %103, %104 : vector<1x2x128xf32>
    %106 = arith.mulf %105, %101 : vector<1x2x128xf32>
    %cst_57 = arith.constant 1.42141378 : f32
    %107 = vector.broadcast %cst_57 : f32 to vector<1x2x128xf32>
    %108 = arith.addf %106, %107 : vector<1x2x128xf32>
    %109 = arith.mulf %108, %101 : vector<1x2x128xf32>
    %cst_58 = arith.constant -0.284496725 : f32
    %110 = vector.broadcast %cst_58 : f32 to vector<1x2x128xf32>
    %111 = arith.addf %109, %110 : vector<1x2x128xf32>
    %112 = arith.mulf %111, %101 : vector<1x2x128xf32>
    %cst_59 = arith.constant 0.254829586 : f32
    %113 = vector.broadcast %cst_59 : f32 to vector<1x2x128xf32>
    %114 = arith.addf %112, %113 : vector<1x2x128xf32>
    %115 = arith.mulf %114, %101 : vector<1x2x128xf32>
    %cst_60 = arith.constant 0.000000e+00 : f32
    %116 = vector.broadcast %cst_60 : f32 to vector<1x2x128xf32>
    %117 = arith.subf %116, %96 : vector<1x2x128xf32>
    %118 = arith.mulf %117, %96 : vector<1x2x128xf32>
    %119 = math.exp %118 : vector<1x2x128xf32>
    %120 = arith.mulf %115, %119 : vector<1x2x128xf32>
    %cst_61 = arith.constant 1.000000e+00 : f32
    %121 = vector.broadcast %cst_61 : f32 to vector<1x2x128xf32>
    %122 = arith.subf %121, %120 : vector<1x2x128xf32>
    %123 = arith.mulf %95, %122 : vector<1x2x128xf32>
    %cst_62 = arith.constant 1.000000e+00 : f32
    %124 = vector.broadcast %cst_62 : f32 to vector<1x2x128xf32>
    %125 = arith.addf %124, %123 : vector<1x2x128xf32>
    %126 = arith.mulf %88, %125 : vector<1x2x128xf32>
    %c0_63 = arith.constant 0 : index
    %c1_64 = arith.constant 1 : index
    %c0_65 = arith.constant 0 : index
    %c0_66 = arith.constant 0 : index
    %127 = vector.load %arg5[%c0_63, %c1_64, %c0_65, %c0_66] : memref<1x4x2x128xf32, #tpu.memory_space<vmem>>, vector<1x1x2x128xf32>
    %128 = vector.shape_cast %127 : vector<1x1x2x128xf32> to vector<1x2x128xf32>
    %129 = vector.shape_cast %126 : vector<1x2x128xf32> to vector<1x1x2x128xf32>
    tpu.vector_store %arg5[%c0_63, %c1_64, %c0_65, %c0_66], %129 {strides = array<i32>} : memref<1x4x2x128xf32, #tpu.memory_space<vmem>>, vector<1x1x2x128xf32>,
    %c2_67 = arith.constant 2 : index
    %c0_68 = arith.constant 0 : index
    %130 = memref.load %arg2[%c2_67, %c0_68] : memref<4x4xf32, #tpu.memory_space<smem>>
    %131 = vector.broadcast %130 : f32 to vector<1x2x128xf32>
    %132 = arith.mulf %1, %131 : vector<1x2x128xf32>
    %c2_69 = arith.constant 2 : index
    %c1_70 = arith.constant 1 : index
    %133 = memref.load %arg2[%c2_69, %c1_70] : memref<4x4xf32, #tpu.memory_space<smem>>
    %134 = vector.broadcast %133 : f32 to vector<1x2x128xf32>
    %135 = arith.mulf %3, %134 : vector<1x2x128xf32>
    %136 = arith.addf %132, %135 : vector<1x2x128xf32>
    %c2_71 = arith.constant 2 : index
    %c2_72 = arith.constant 2 : index
    %137 = memref.load %arg2[%c2_71, %c2_72] : memref<4x4xf32, #tpu.memory_space<smem>>
    %138 = vector.broadcast %137 : f32 to vector<1x2x128xf32>
    %139 = arith.mulf %5, %138 : vector<1x2x128xf32>
    %140 = arith.addf %136, %139 : vector<1x2x128xf32>
    %c2_73 = arith.constant 2 : index
    %c3_74 = arith.constant 3 : index
    %141 = memref.load %arg2[%c2_73, %c3_74] : memref<4x4xf32, #tpu.memory_space<smem>>
    %142 = vector.broadcast %141 : f32 to vector<1x2x128xf32>
    %143 = arith.mulf %7, %142 : vector<1x2x128xf32>
    %144 = arith.addf %140, %143 : vector<1x2x128xf32>
    %c2_75 = arith.constant 2 : index
    %145 = memref.load %arg3[%c2_75] : memref<4xf32, #tpu.memory_space<smem>>
    %146 = vector.broadcast %145 : f32 to vector<1x2x128xf32>
    %147 = arith.addf %144, %146 : vector<1x2x128xf32>
    %cst_76 = arith.constant 5.000000e-01 : f32
    %148 = vector.broadcast %cst_76 : f32 to vector<1x2x128xf32>
    %149 = arith.mulf %148, %147 : vector<1x2x128xf32>
    %cst_77 = arith.constant 0.707106769 : f32
    %150 = vector.broadcast %cst_77 : f32 to vector<1x2x128xf32>
    %151 = arith.mulf %147, %150 : vector<1x2x128xf32>
    %cst_78 = arith.constant 0.000000e+00 : f32
    %152 = vector.broadcast %cst_78 : f32 to vector<1x2x128xf32>
    %153 = arith.cmpf oge, %151, %152 : vector<1x2x128xf32>
    %cst_79 = arith.constant 1.000000e+00 : f32
    %cst_80 = arith.constant -1.000000e+00 : f32
    %154 = vector.broadcast %cst_79 : f32 to vector<1x2x128xf32>
    %155 = vector.broadcast %cst_80 : f32 to vector<1x2x128xf32>
    %156 = arith.select %153, %154, %155 : vector<1x2x128xi1>, vector<1x2x128xf32>
    %157 = math.absf %151 : vector<1x2x128xf32>
    %cst_81 = arith.constant 0.327591091 : f32
    %158 = vector.broadcast %cst_81 : f32 to vector<1x2x128xf32>
    %159 = arith.mulf %158, %157 : vector<1x2x128xf32>
    %cst_82 = arith.constant 1.000000e+00 : f32
    %160 = vector.broadcast %cst_82 : f32 to vector<1x2x128xf32>
    %161 = arith.addf %160, %159 : vector<1x2x128xf32>
    %162 = tpu.reciprocal %161 {approx = true} : vector<1x2x128xf32> -> vector<1x2x128xf32>
    %cst_83 = arith.constant 1.06140542 : f32
    %163 = vector.broadcast %cst_83 : f32 to vector<1x2x128xf32>
    %164 = arith.mulf %163, %162 : vector<1x2x128xf32>
    %cst_84 = arith.constant -1.45315206 : f32
    %165 = vector.broadcast %cst_84 : f32 to vector<1x2x128xf32>
    %166 = arith.addf %164, %165 : vector<1x2x128xf32>
    %167 = arith.mulf %166, %162 : vector<1x2x128xf32>
    %cst_85 = arith.constant 1.42141378 : f32
    %168 = vector.broadcast %cst_85 : f32 to vector<1x2x128xf32>
    %169 = arith.addf %167, %168 : vector<1x2x128xf32>
    %170 = arith.mulf %169, %162 : vector<1x2x128xf32>
    %cst_86 = arith.constant -0.284496725 : f32
    %171 = vector.broadcast %cst_86 : f32 to vector<1x2x128xf32>
    %172 = arith.addf %170, %171 : vector<1x2x128xf32>
    %173 = arith.mulf %172, %162 : vector<1x2x128xf32>
    %cst_87 = arith.constant 0.254829586 : f32
    %174 = vector.broadcast %cst_87 : f32 to vector<1x2x128xf32>
    %175 = arith.addf %173, %174 : vector<1x2x128xf32>
    %176 = arith.mulf %175, %162 : vector<1x2x128xf32>
    %cst_88 = arith.constant 0.000000e+00 : f32
    %177 = vector.broadcast %cst_88 : f32 to vector<1x2x128xf32>
    %178 = arith.subf %177, %157 : vector<1x2x128xf32>
    %179 = arith.mulf %178, %157 : vector<1x2x128xf32>
    %180 = math.exp %179 : vector<1x2x128xf32>
    %181 = arith.mulf %176, %180 : vector<1x2x128xf32>
    %cst_89 = arith.constant 1.000000e+00 : f32
    %182 = vector.broadcast %cst_89 : f32 to vector<1x2x128xf32>
    %183 = arith.subf %182, %181 : vector<1x2x128xf32>
    %184 = arith.mulf %156, %183 : vector<1x2x128xf32>
    %cst_90 = arith.constant 1.000000e+00 : f32
    %185 = vector.broadcast %cst_90 : f32 to vector<1x2x128xf32>
    %186 = arith.addf %185, %184 : vector<1x2x128xf32>
    %187 = arith.mulf %149, %186 : vector<1x2x128xf32>
    %c0_91 = arith.constant 0 : index
    %c2_92 = arith.constant 2 : index
    %c0_93 = arith.constant 0 : index
    %c0_94 = arith.constant 0 : index
    %188 = vector.load %arg5[%c0_91, %c2_92, %c0_93, %c0_94] : memref<1x4x2x128xf32, #tpu.memory_space<vmem>>, vector<1x1x2x128xf32>
    %189 = vector.shape_cast %188 : vector<1x1x2x128xf32> to vector<1x2x128xf32>
    %190 = vector.shape_cast %187 : vector<1x2x128xf32> to vector<1x1x2x128xf32>
    tpu.vector_store %arg5[%c0_91, %c2_92, %c0_93, %c0_94], %190 {strides = array<i32>} : memref<1x4x2x128xf32, #tpu.memory_space<vmem>>, vector<1x1x2x128xf32>,
    %c3_95 = arith.constant 3 : index
    %c0_96 = arith.constant 0 : index
    %191 = memref.load %arg2[%c3_95, %c0_96] : memref<4x4xf32, #tpu.memory_space<smem>>
    %192 = vector.broadcast %191 : f32 to vector<1x2x128xf32>
    %193 = arith.mulf %1, %192 : vector<1x2x128xf32>
    %c3_97 = arith.constant 3 : index
    %c1_98 = arith.constant 1 : index
    %194 = memref.load %arg2[%c3_97, %c1_98] : memref<4x4xf32, #tpu.memory_space<smem>>
    %195 = vector.broadcast %194 : f32 to vector<1x2x128xf32>
    %196 = arith.mulf %3, %195 : vector<1x2x128xf32>
    %197 = arith.addf %193, %196 : vector<1x2x128xf32>
    %c3_99 = arith.constant 3 : index
    %c2_100 = arith.constant 2 : index
    %198 = memref.load %arg2[%c3_99, %c2_100] : memref<4x4xf32, #tpu.memory_space<smem>>
    %199 = vector.broadcast %198 : f32 to vector<1x2x128xf32>
    %200 = arith.mulf %5, %199 : vector<1x2x128xf32>
    %201 = arith.addf %197, %200 : vector<1x2x128xf32>
    %c3_101 = arith.constant 3 : index
    %c3_102 = arith.constant 3 : index
    %202 = memref.load %arg2[%c3_101, %c3_102] : memref<4x4xf32, #tpu.memory_space<smem>>
    %203 = vector.broadcast %202 : f32 to vector<1x2x128xf32>
    %204 = arith.mulf %7, %203 : vector<1x2x128xf32>
    %205 = arith.addf %201, %204 : vector<1x2x128xf32>
    %c3_103 = arith.constant 3 : index
    %206 = memref.load %arg3[%c3_103] : memref<4xf32, #tpu.memory_space<smem>>
    %207 = vector.broadcast %206 : f32 to vector<1x2x128xf32>
    %208 = arith.addf %205, %207 : vector<1x2x128xf32>
    %cst_104 = arith.constant 5.000000e-01 : f32
    %209 = vector.broadcast %cst_104 : f32 to vector<1x2x128xf32>
    %210 = arith.mulf %209, %208 : vector<1x2x128xf32>
    %cst_105 = arith.constant 0.707106769 : f32
    %211 = vector.broadcast %cst_105 : f32 to vector<1x2x128xf32>
    %212 = arith.mulf %208, %211 : vector<1x2x128xf32>
    %cst_106 = arith.constant 0.000000e+00 : f32
    %213 = vector.broadcast %cst_106 : f32 to vector<1x2x128xf32>
    %214 = arith.cmpf oge, %212, %213 : vector<1x2x128xf32>
    %cst_107 = arith.constant 1.000000e+00 : f32
    %cst_108 = arith.constant -1.000000e+00 : f32
    %215 = vector.broadcast %cst_107 : f32 to vector<1x2x128xf32>
    %216 = vector.broadcast %cst_108 : f32 to vector<1x2x128xf32>
    %217 = arith.select %214, %215, %216 : vector<1x2x128xi1>, vector<1x2x128xf32>
    %218 = math.absf %212 : vector<1x2x128xf32>
    %cst_109 = arith.constant 0.327591091 : f32
    %219 = vector.broadcast %cst_109 : f32 to vector<1x2x128xf32>
    %220 = arith.mulf %219, %218 : vector<1x2x128xf32>
    %cst_110 = arith.constant 1.000000e+00 : f32
    %221 = vector.broadcast %cst_110 : f32 to vector<1x2x128xf32>
    %222 = arith.addf %221, %220 : vector<1x2x128xf32>
    %223 = tpu.reciprocal %222 {approx = true} : vector<1x2x128xf32> -> vector<1x2x128xf32>
    %cst_111 = arith.constant 1.06140542 : f32
    %224 = vector.broadcast %cst_111 : f32 to vector<1x2x128xf32>
    %225 = arith.mulf %224, %223 : vector<1x2x128xf32>
    %cst_112 = arith.constant -1.45315206 : f32
    %226 = vector.broadcast %cst_112 : f32 to vector<1x2x128xf32>
    %227 = arith.addf %225, %226 : vector<1x2x128xf32>
    %228 = arith.mulf %227, %223 : vector<1x2x128xf32>
    %cst_113 = arith.constant 1.42141378 : f32
    %229 = vector.broadcast %cst_113 : f32 to vector<1x2x128xf32>
    %230 = arith.addf %228, %229 : vector<1x2x128xf32>
    %231 = arith.mulf %230, %223 : vector<1x2x128xf32>
    %cst_114 = arith.constant -0.284496725 : f32
    %232 = vector.broadcast %cst_114 : f32 to vector<1x2x128xf32>
    %233 = arith.addf %231, %232 : vector<1x2x128xf32>
    %234 = arith.mulf %233, %223 : vector<1x2x128xf32>
    %cst_115 = arith.constant 0.254829586 : f32
    %235 = vector.broadcast %cst_115 : f32 to vector<1x2x128xf32>
    %236 = arith.addf %234, %235 : vector<1x2x128xf32>
    %237 = arith.mulf %236, %223 : vector<1x2x128xf32>
    %cst_116 = arith.constant 0.000000e+00 : f32
    %238 = vector.broadcast %cst_116 : f32 to vector<1x2x128xf32>
    %239 = arith.subf %238, %218 : vector<1x2x128xf32>
    %240 = arith.mulf %239, %218 : vector<1x2x128xf32>
    %241 = math.exp %240 : vector<1x2x128xf32>
    %242 = arith.mulf %237, %241 : vector<1x2x128xf32>
    %cst_117 = arith.constant 1.000000e+00 : f32
    %243 = vector.broadcast %cst_117 : f32 to vector<1x2x128xf32>
    %244 = arith.subf %243, %242 : vector<1x2x128xf32>
    %245 = arith.mulf %217, %244 : vector<1x2x128xf32>
    %cst_118 = arith.constant 1.000000e+00 : f32
    %246 = vector.broadcast %cst_118 : f32 to vector<1x2x128xf32>
    %247 = arith.addf %246, %245 : vector<1x2x128xf32>
    %248 = arith.mulf %210, %247 : vector<1x2x128xf32>
    %c0_119 = arith.constant 0 : index
    %c3_120 = arith.constant 3 : index
    %c0_121 = arith.constant 0 : index
    %c0_122 = arith.constant 0 : index
    %249 = vector.load %arg5[%c0_119, %c3_120, %c0_121, %c0_122] : memref<1x4x2x128xf32, #tpu.memory_space<vmem>>, vector<1x1x2x128xf32>
    %250 = vector.shape_cast %249 : vector<1x1x2x128xf32> to vector<1x2x128xf32>
    %251 = vector.shape_cast %248 : vector<1x2x128xf32> to vector<1x1x2x128xf32>
    tpu.vector_store %arg5[%c0_119, %c3_120, %c0_121, %c0_122], %251 {strides = array<i32>} : memref<1x4x2x128xf32, #tpu.memory_space<vmem>>, vector<1x1x2x128xf32>,
    return
  }
  func.func @transform_0(%arg0: i32, %arg1: i32) -> (i32, i32) {
    %c0_i32 = arith.constant 0 : i32
    %c0_i32_0 = arith.constant 0 : i32
    %c0_i32_1 = arith.constant 0 : i32
    return %c0_i32, %c0_i32_0 : i32, i32
  }
  func.func @transform_1(%arg0: i32, %arg1: i32) -> i32 {
    %c0_i32 = arith.constant 0 : i32
    %c0_i32_0 = arith.constant 0 : i32
    return %c0_i32 : i32
  }
  func.func @transform_2(%arg0: i32, %arg1: i32) -> (i32, i32, i32, i32) {
    %c0_i32 = arith.constant 0 : i32
    %c0_i32_0 = arith.constant 0 : i32
    %c0_i32_1 = arith.constant 0 : i32
    return %arg0, %c0_i32, %arg1, %c0_i32_0 : i32, i32, i32, i32
  }
  func.func @transform_3(%arg0: i32, %arg1: i32) -> (i32, i32, i32, i32) {
    %c0_i32 = arith.constant 0 : i32
    %c0_i32_0 = arith.constant 0 : i32
    %c0_i32_1 = arith.constant 0 : i32
    return %arg0, %c0_i32, %arg1, %c0_i32_0 : i32, i32, i32, i32
  }
}

</mosaic_0001>

<llo_original>
// kernel: _lambda_.1
$region0: #{_lambda_.1}
  #allocation0 [shape = 'u32[]', space=smem, size = 0x4, offset = 0x4, fixed_abs, tag = 'smem constant byte address 0x4 - core index']
  #allocation1 [shape = 'u32[72,128]{1,0:T(1,128)}', space=vmem, size = 0x9000, scoped, tag = 'internal scratch']
  %s0 = inlined_call_operand.vmem [shape: f32[4,4], index: 0, kind: input, shape index: {}]
  %s1 = inlined_call_operand.vmem [shape: f32[4], index: 1, kind: input, shape index: {}]
  %s2 = inlined_call_operand.vmem [shape: f32[2,4,2,128], index: 2, kind: input, shape index: {}]
  %s3 = inlined_call_operand.vmem [shape: f32[2,4,2,128], index: 3, kind: output, shape index: {}]
  %s4 = sld [smem:[#allocation0]]
  $region53: #{_lambda_.1} parent=0
    _
  %s6 = ssub.s32 1, %s4
  %s7 = scalar_select 0, %s6, %s4
  $region1: #{_lambda_.1} parent=0
    #allocation2 [shape = 'u8[2048]{0}', space=smem, size = 0x800, scoped, tag = 'input window, operand 0, single buffered']
    #allocation3 [shape = 's32[2]{0}', space=sflag, size = 0x8, scoped, tag = 'scoped memory for _lambda_.1']
    #allocation4 [shape = 'u8[512]{0}', space=smem, size = 0x200, scoped, tag = 'input window, operand 1, single buffered']
    #allocation5 [shape = 's32[1]{0}', space=sflag, size = 0x4, scoped, tag = 'scoped memory for _lambda_.1']
    %8 = vsyncpa [#allocation3], 0
    %9 = vsyncpa [#allocation5], 0
    loop: start=0, step=1, limit=4
    $region2: #{_lambda_.1} parent=1 // loop_pre_header
      _
    $region3: #{_lambda_.1} parent=1 // loop_header
      %s11 = sphi 0, %s15
      %p12 = scmp.ge.s32.totalorder %s11, 4
      %s18 = sphi 0, %s30
      %s19 = sphi 0, %s26
      %s20 = sphi 0, %s18
      %s21 = sphi 0, %s19
      %s22 = sphi 0, %s20
      %s23 = sphi 0, %s21
      %s31 = sphi 0, %s31
      %s33 = sphi 0, %s31
      %s34 = sphi 0, %s33
      %s48 = sphi 0, %s34
      %s52 = sphi 0, %s52
      %s54 = sphi 0, %s52
      %s55 = sphi 0, %s54
      %s69 = sphi 0, %s55
      %s77 = sphi 0, %s79
      %s80 = sphi 0, %s77
      %s81 = sphi 0, %s80
      %s97 = sphi 0, %s81
      %s105 = sphi 0, %s107
      %s108 = sphi 0, %s105
      %s109 = sphi 0, %s108
      %s125 = sphi 0, %s109
    $region4: #{_lambda_.1} parent=1 // loop_header_branch
      %14 = sbr.rel (%p12) target = $region8
    $region5: #{_lambda_.1} parent=1 // loop_body
      %s16 = ssub.s32 %s11, 1
      %s17 = ssub.s32 %s11, 2
      %s24 = sadd.s32 1, %s19
      %p25 = scmp.ge.s32.totalorder %s24, 1
      %s26 = scalar_select %p25, 0, %s24
      %s27 = sadd.s32 1, %s18
      %s28 = scalar_select %p25, %s27, %s18
      %p29 = scmp.ge.s32.totalorder %s28, 2
      %s30 = scalar_select %p29, 0, %s28
      %s32 = sadd.s32 %s31, 1
      %p35 = scmp.eq.s32.totalorder %s11, 1
      %p36 = scmp.ne.s32.totalorder %s31, %s33
      %p37 = scmp.eq.s32.totalorder %s11, 0
      %p38 = por %p36, %p37
      %p39 = scmp.ne.s32.totalorder %s31, %s33
      %p40 = scmp.eq.s32.totalorder %s16, 1
      %p41 = por %p39, %p40
      %p42 = scmp.ne.s32.totalorder %s33, %s34
      %p43 = scmp.eq.s32.totalorder %s16, 0
      %p44 = por %p42, %p43
      %p45 = scmp.ne.s32.totalorder %s33, %s34
      %p46 = scmp.eq.s32.totalorder %s17, 1
      %p47 = por %p45, %p46
      %p49 = scmp.ne.s32.totalorder %s34, %s48
      %p50 = scmp.eq.s32.totalorder %s17, 0
      %p51 = por %p49, %p50
      %s53 = sadd.s32 %s52, 1
      %p56 = scmp.eq.s32.totalorder %s11, 1
      %p57 = scmp.ne.s32.totalorder %s52, %s54
      %p58 = scmp.eq.s32.totalorder %s11, 0
      %p59 = por %p57, %p58
      %p60 = scmp.ne.s32.totalorder %s52, %s54
      %p61 = scmp.eq.s32.totalorder %s16, 1
      %p62 = por %p60, %p61
      %p63 = scmp.ne.s32.totalorder %s54, %s55
      %p64 = scmp.eq.s32.totalorder %s16, 0
      %p65 = por %p63, %p64
      %p66 = scmp.ne.s32.totalorder %s54, %s55
      %p67 = scmp.eq.s32.totalorder %s17, 1
      %p68 = por %p66, %p67
      %p70 = scmp.ne.s32.totalorder %s55, %s69
      %p71 = scmp.eq.s32.totalorder %s17, 0
      %p72 = por %p70, %p71
      %s73 = ssub.s32 %s18, %s30
      %s74 = ssub.s32 %s19, %s26
      %s75 = sor.u32 %s73, %s74
      %p76 = scmp.eq.s32.totalorder %s75, 0
      %s78 = sadd.s32 %s77, 1
      %s79 = scalar_select %p76, %s77, %s78
      %p82 = pneg %p76
      %p83 = scmp.eq.s32.totalorder %s11, 1
      %p84 = por %p82, %p83
      %p85 = scmp.ne.s32.totalorder %s77, %s80
      %p86 = scmp.eq.s32.totalorder %s11, 0
      %p87 = por %p85, %p86
      %p88 = scmp.ne.s32.totalorder %s77, %s80
      %p89 = scmp.eq.s32.totalorder %s16, 1
      %p90 = por %p88, %p89
      %p91 = scmp.ne.s32.totalorder %s80, %s81
      %p92 = scmp.eq.s32.totalorder %s16, 0
      %p93 = por %p91, %p92
      %p94 = scmp.ne.s32.totalorder %s80, %s81
      %p95 = scmp.eq.s32.totalorder %s17, 1
      %p96 = por %p94, %p95
      %p98 = scmp.ne.s32.totalorder %s81, %s97
      %p99 = scmp.eq.s32.totalorder %s17, 0
      %p100 = por %p98, %p99
      %s101 = ssub.s32 %s18, %s30
      %s102 = ssub.s32 %s19, %s26
      %s103 = sor.u32 %s101, %s102
      %p104 = scmp.eq.s32.totalorder %s103, 0
      %s106 = sadd.s32 %s105, 1
      %s107 = scalar_select %p104, %s105, %s106
      %p110 = pneg %p104
      %p111 = scmp.eq.s32.totalorder %s11, 1
      %p112 = por %p110, %p111
      %p113 = scmp.ne.s32.totalorder %s105, %s108
      %p114 = scmp.eq.s32.totalorder %s11, 0
      %p115 = por %p113, %p114
      %p116 = scmp.ne.s32.totalorder %s105, %s108
      %p117 = scmp.eq.s32.totalorder %s16, 1
      %p118 = por %p116, %p117
      %p119 = scmp.ne.s32.totalorder %s108, %s109
      %p120 = scmp.eq.s32.totalorder %s16, 0
      %p121 = por %p119, %p120
      %p122 = scmp.ne.s32.totalorder %s108, %s109
      %p123 = scmp.eq.s32.totalorder %s17, 1
      %p124 = por %p122, %p123
      %p126 = scmp.ne.s32.totalorder %s109, %s125
      %p127 = scmp.eq.s32.totalorder %s17, 0
      %p128 = por %p126, %p127
      %p129 = scmp.le.s32.totalorder 1, %s11
      %p130 = scmp.lt.s32.totalorder %s11, 3
      %p131 = pnand %p129, %p130
      %p132 = pneg %p131
      // Predicated region
      $region9: #{_lambda_.1} parent=5 // pred_check
        _
      $region10: #{_lambda_.1} parent=5 // pred_check_branch
        %134 = sbr.rel (%p131) target = $region12
      $region11: #{_lambda_.1} parent=5 // pred_region
        %s135 = ssub.s32 %s11, 1
        // Predicated region
        $region13: #{_lambda_.1} parent=11 // pred_check
          %p136 = pneg %p44
        $region14: #{_lambda_.1} parent=11 // pred_check_branch
          %138 = sbr.rel (%p136) target = $region16
        $region15: #{_lambda_.1} parent=11 // pred_region
          %140 = vsyncadd [#allocation3], 0
          %s142 = sshll.u32 %s0, 4
          %s143 = int_to_ptr.vmem [resolvable:$true] %s142
          %145 = dma.vmem_to_smem %s143, 64, [#allocation2], [#allocation3]
        $region16: #{_lambda_.1} parent=11 // pred_fallthru
          _
        // Predicated region
        $region17: #{_lambda_.1} parent=11 // pred_check
          %p146 = pneg %p65
        $region18: #{_lambda_.1} parent=11 // pred_check_branch
          %148 = sbr.rel (%p146) target = $region20
        $region19: #{_lambda_.1} parent=11 // pred_region
          %150 = vsyncadd [#allocation5], 0
          %s152 = sshll.u32 %s1, 4
          %s153 = int_to_ptr.vmem [resolvable:$true] %s152
          %155 = dma.vmem_to_smem %s153, 16, [#allocation4], [#allocation5]
        $region20: #{_lambda_.1} parent=11 // pred_fallthru
          _
      $region12: #{_lambda_.1} parent=5 // pred_fallthru
        _
      %p156 = scmp.lt.s32.totalorder %s11, 2
      // Predicated region
      $region21: #{_lambda_.1} parent=5 // pred_check
        %p157 = pneg %p156
      $region22: #{_lambda_.1} parent=5 // pred_check_branch
        %159 = sbr.rel (%p157) target = $region24
      $region23: #{_lambda_.1} parent=5 // pred_region
        // Predicated region
        $region25: #{_lambda_.1} parent=23 // pred_check
          %p160 = pneg %p87
        $region26: #{_lambda_.1} parent=23 // pred_check_branch
          %162 = sbr.rel (%p160) target = $region28
        $region27: #{_lambda_.1} parent=23 // pred_region
          %p163 = scmp.lt.s32.totalorder %s18, 1
          %s164 = scalar_select %p163, %s18, 1
          %p165 = scmp.lt.s32.totalorder %s19, 0
          %s166 = scalar_select %p165, %s19, 0
          %s167 = smul.addr %s164, 4
          %s168 = sadd.s32 %s166, %s167
          %s169 = smul.addr %s168, 2
          %s170 = scalar_lea.vmem %s2, %s169
        $region28: #{_lambda_.1} parent=23 // pred_fallthru
          _
      $region24: #{_lambda_.1} parent=5 // pred_fallthru
        _
      %p171 = scmp.le.s32.totalorder 1, %s11
      %p172 = scmp.lt.s32.totalorder %s11, 3
      %p173 = pnand %p171, %p172
      %p174 = pneg %p173
      // Predicated region
      $region29: #{_lambda_.1} parent=5 // pred_check
        _
      $region30: #{_lambda_.1} parent=5 // pred_check_branch
        %176 = sbr.rel (%p173) target = $region32
      $region31: #{_lambda_.1} parent=5 // pred_region
        %s177 = ssub.s32 %s11, 1
        // Predicated region
        $region33: #{_lambda_.1} parent=31 // pred_check
          %p178 = pneg %p44
        $region34: #{_lambda_.1} parent=31 // pred_check_branch
          %180 = sbr.rel (%p178) target = $region36
        $region35: #{_lambda_.1} parent=31 // pred_region
          %182 = dma.done [#allocation3], 64
        $region36: #{_lambda_.1} parent=31 // pred_fallthru
          _
        // Predicated region
        $region37: #{_lambda_.1} parent=31 // pred_check
          %p183 = pneg %p65
        $region38: #{_lambda_.1} parent=31 // pred_check_branch
          %185 = sbr.rel (%p183) target = $region40
        $region39: #{_lambda_.1} parent=31 // pred_region
          %187 = dma.done [#allocation5], 16
        $region40: #{_lambda_.1} parent=31 // pred_fallthru
          _
        %188 = sfence
        %p189 = pneg %p44
        %p190 = pneg %p41
        %p191 = pneg %p65
        %p192 = pneg %p62
        %p193 = scmp.lt.s32.totalorder %s20, 1
        %s194 = scalar_select %p193, %s20, 1
        %p195 = scmp.lt.s32.totalorder %s21, 0
        %s196 = scalar_select %p195, %s21, 0
        %s197 = smul.addr %s194, 4
        %s198 = sadd.s32 %s196, %s197
        %s199 = smul.addr %s198, 2
        %s200 = scalar_lea.vmem %s2, %s199
        %p201 = pneg %p93
        %p202 = pneg %p90
        %p203 = pneg %p121
        %p204 = pneg %p118
        %p205 = scmp.lt.s32.totalorder %s20, 1
        %s206 = scalar_select %p205, %s20, 1
        %p207 = scmp.lt.s32.totalorder %s21, 0
        %s208 = scalar_select %p207, %s21, 0
        %s209 = smul.addr %s206, 4
        %s210 = sadd.s32 %s208, %s209
        %s211 = smul.addr %s210, 2
        %s212 = scalar_lea.vmem %s3, %s211
        %p213 = scmp.lt.s32.totalorder %s20, 1
        %s214 = scalar_select %p213, %s20, 1
        %p215 = scmp.lt.s32.totalorder %s21, 0
        %s216 = scalar_select %p215, %s21, 0
        %s217 = smul.addr %s214, 4
        %s218 = sadd.s32 %s216, %s217
        %s219 = smul.addr %s218, 2
        %s220 = scalar_lea.vmem %s2, %s219
        %p221 = scmp.lt.s32.totalorder %s20, 1
        %s222 = scalar_select %p221, %s20, 1
        %p223 = scmp.lt.s32.totalorder %s21, 0
        %s224 = scalar_select %p223, %s21, 0
        %s225 = smul.addr %s222, 4
        %s226 = sadd.s32 %s224, %s225
        %s227 = smul.addr %s226, 2
        %s228 = scalar_lea.vmem %s3, %s227
        %v229 = vld [vmem:[%s220] sm:$0x3]
        %s230 = scalar_lea.vmem %s220, 2
        %v231 = vld [vmem:[%s230] sm:$0x3]
        %s232 = scalar_lea.vmem %s220, 4
        %v233 = vld [vmem:[%s232] sm:$0x3]
        %s234 = scalar_lea.vmem %s220, 6
        %v235 = vld [vmem:[%s234] sm:$0x3]
        %s236 = sld [smem:[#allocation2]]
        %v237 = vstv %s236
        %v238 = vmul.f32 %v229, %v237
        %s239 = sld [smem:[#allocation2 + $0x1]]
        %v240 = vstv %s239
        %v241 = vmul.f32 %v231, %v240
        %v242 = vadd.f32 %v238, %v241
        %s243 = sld [smem:[#allocation2 + $0x2]]
        %v244 = vstv %s243
        %v245 = vmul.f32 %v233, %v244
        %v246 = vadd.f32 %v242, %v245
        %s247 = sld [smem:[#allocation2 + $0x3]]
        %v248 = vstv %s247
        %v249 = vmul.f32 %v235, %v248
        %v250 = vadd.f32 %v246, %v249
        %s251 = sld [smem:[#allocation4]]
        %v252 = vstv %s251
        %v253 = vadd.f32 %v250, %v252
        %v254 = vmul.f32 %v253, 0.5
        %v255 = vmul.f32 %v253, 0.70710677
        %vm256 = vcmp.ge.f32.partialorder %v255, 0.0
        %v257 = vsel %vm256, 1.0, -1.0
        %v258 = vand.u32 2147483647, %v255
        %v259 = vmul.f32 %v258, 0.3275911
        %v260 = vadd.f32 %v259, 1.0
        %v261 = vrcp.pop %v260
        %v262 = vmul.f32 %v261, 1.0614054
        %v263 = vadd.f32 %v262, -1.4531521
        %v264 = vmul.f32 %v263, %v261
        %v265 = vadd.f32 %v264, 1.4214138
        %v266 = vmul.f32 %v265, %v261
        %v267 = vadd.f32 %v266, -0.28449672
        %v268 = vmul.f32 %v267, %v261
        %v269 = vadd.f32 %v268, 0.2548296
        %v270 = vmul.f32 %v269, %v261
        %v271 = vsub.f32 0.0, %v258
        %v272 = vmul.f32 %v271, %v258
        %v273 = vmul.f32 %v272, 1.442695
        %v274 = vpow.pop %v273
        %v275 = vmul.f32 %v270, %v274
        %v276 = vsub.f32 1.0, %v275
        %v277 = vmul.f32 %v257, %v276
        %v278 = vadd.f32 %v277, 1.0
        %v279 = vmul.f32 %v254, %v278
        %280 = vst [vmem:[%s228] sm:$0x3] %v279
        %s281 = sld [smem:[#allocation2 + $0x80]]
        %v282 = vstv %s281
        %v283 = vmul.f32 %v229, %v282
        %s284 = sld [smem:[#allocation2 + $0x81]]
        %v285 = vstv %s284
        %v286 = vmul.f32 %v231, %v285
        %v287 = vadd.f32 %v283, %v286
        %s288 = sld [smem:[#allocation2 + $0x82]]
        %v289 = vstv %s288
        %v290 = vmul.f32 %v233, %v289
        %v291 = vadd.f32 %v287, %v290
        %s292 = sld [smem:[#allocation2 + $0x83]]
        %v293 = vstv %s292
        %v294 = vmul.f32 %v235, %v293
        %v295 = vadd.f32 %v291, %v294
        %s296 = sld [smem:[#allocation4 + $0x1]]
        %v297 = vstv %s296
        %v298 = vadd.f32 %v295, %v297
        %v299 = vmul.f32 %v298, 0.5
        %v300 = vmul.f32 %v298, 0.70710677
        %vm301 = vcmp.ge.f32.partialorder %v300, 0.0
        %v302 = vsel %vm301, 1.0, -1.0
        %v303 = vand.u32 2147483647, %v300
        %v304 = vmul.f32 %v303, 0.3275911
        %v305 = vadd.f32 %v304, 1.0
        %v306 = vrcp.pop %v305
        %v307 = vmul.f32 %v306, 1.0614054
        %v308 = vadd.f32 %v307, -1.4531521
        %v309 = vmul.f32 %v308, %v306
        %v310 = vadd.f32 %v309, 1.4214138
        %v311 = vmul.f32 %v310, %v306
        %v312 = vadd.f32 %v311, -0.28449672
        %v313 = vmul.f32 %v312, %v306
        %v314 = vadd.f32 %v313, 0.2548296
        %v315 = vmul.f32 %v314, %v306
        %v316 = vsub.f32 0.0, %v303
        %v317 = vmul.f32 %v316, %v303
        %v318 = vmul.f32 %v317, 1.442695
        %v319 = vpow.pop %v318
        %v320 = vmul.f32 %v315, %v319
        %v321 = vsub.f32 1.0, %v320
        %v322 = vmul.f32 %v302, %v321
        %v323 = vadd.f32 %v322, 1.0
        %v324 = vmul.f32 %v299, %v323
        %s325 = scalar_lea.vmem %s228, 2
        %326 = vst [vmem:[%s325] sm:$0x3] %v324
        %s327 = sld [smem:[#allocation2 + $0x100]]
        %v328 = vstv %s327
        %v329 = vmul.f32 %v229, %v328
        %s330 = sld [smem:[#allocation2 + $0x101]]
        %v331 = vstv %s330
        %v332 = vmul.f32 %v231, %v331
        %v333 = vadd.f32 %v329, %v332
        %s334 = sld [smem:[#allocation2 + $0x102]]
        %v335 = vstv %s334
        %v336 = vmul.f32 %v233, %v335
        %v337 = vadd.f32 %v333, %v336
        %s338 = sld [smem:[#allocation2 + $0x103]]
        %v339 = vstv %s338
        %v340 = vmul.f32 %v235, %v339
        %v341 = vadd.f32 %v337, %v340
        %s342 = sld [smem:[#allocation4 + $0x2]]
        %v343 = vstv %s342
        %v344 = vadd.f32 %v341, %v343
        %v345 = vmul.f32 %v344, 0.5
        %v346 = vmul.f32 %v344, 0.70710677
        %vm347 = vcmp.ge.f32.partialorder %v346, 0.0
        %v348 = vsel %vm347, 1.0, -1.0
        %v349 = vand.u32 2147483647, %v346
        %v350 = vmul.f32 %v349, 0.3275911
        %v351 = vadd.f32 %v350, 1.0
        %v352 = vrcp.pop %v351
        %v353 = vmul.f32 %v352, 1.0614054
        %v354 = vadd.f32 %v353, -1.4531521
        %v355 = vmul.f32 %v354, %v352
        %v356 = vadd.f32 %v355, 1.4214138
        %v357 = vmul.f32 %v356, %v352
        %v358 = vadd.f32 %v357, -0.28449672
        %v359 = vmul.f32 %v358, %v352
        %v360 = vadd.f32 %v359, 0.2548296
        %v361 = vmul.f32 %v360, %v352
        %v362 = vsub.f32 0.0, %v349
        %v363 = vmul.f32 %v362, %v349
        %v364 = vmul.f32 %v363, 1.442695
        %v365 = vpow.pop %v364
        %v366 = vmul.f32 %v361, %v365
        %v367 = vsub.f32 1.0, %v366
        %v368 = vmul.f32 %v348, %v367
        %v369 = vadd.f32 %v368, 1.0
        %v370 = vmul.f32 %v345, %v369
        %s371 = scalar_lea.vmem %s228, 4
        %372 = vst [vmem:[%s371] sm:$0x3] %v370
        %s373 = sld [smem:[#allocation2 + $0x180]]
        %v374 = vstv %s373
        %v375 = vmul.f32 %v229, %v374
        %s376 = sld [smem:[#allocation2 + $0x181]]
        %v377 = vstv %s376
        %v378 = vmul.f32 %v231, %v377
        %v379 = vadd.f32 %v375, %v378
        %s380 = sld [smem:[#allocation2 + $0x182]]
        %v381 = vstv %s380
        %v382 = vmul.f32 %v233, %v381
        %v383 = vadd.f32 %v379, %v382
        %s384 = sld [smem:[#allocation2 + $0x183]]
        %v385 = vstv %s384
        %v386 = vmul.f32 %v235, %v385
        %v387 = vadd.f32 %v383, %v386
        %s388 = sld [smem:[#allocation4 + $0x3]]
        %v389 = vstv %s388
        %v390 = vadd.f32 %v387, %v389
        %v391 = vmul.f32 %v390, 0.5
        %v392 = vmul.f32 %v390, 0.70710677
        %vm393 = vcmp.ge.f32.partialorder %v392, 0.0
        %v394 = vsel %vm393, 1.0, -1.0
        %v395 = vand.u32 2147483647, %v392
        %v396 = vmul.f32 %v395, 0.3275911
        %v397 = vadd.f32 %v396, 1.0
        %v398 = vrcp.pop %v397
        %v399 = vmul.f32 %v398, 1.0614054
        %v400 = vadd.f32 %v399, -1.4531521
        %v401 = vmul.f32 %v400, %v398
        %v402 = vadd.f32 %v401, 1.4214138
        %v403 = vmul.f32 %v402, %v398
        %v404 = vadd.f32 %v403, -0.28449672
        %v405 = vmul.f32 %v404, %v398
        %v406 = vadd.f32 %v405, 0.2548296
        %v407 = vmul.f32 %v406, %v398
        %v408 = vsub.f32 0.0, %v395
        %v409 = vmul.f32 %v408, %v395
        %v410 = vmul.f32 %v409, 1.442695
        %v411 = vpow.pop %v410
        %v412 = vmul.f32 %v407, %v411
        %v413 = vsub.f32 1.0, %v412
        %v414 = vmul.f32 %v394, %v413
        %v415 = vadd.f32 %v414, 1.0
        %v416 = vmul.f32 %v391, %v415
        %s417 = scalar_lea.vmem %s228, 6
        %418 = vst [vmem:[%s417] sm:$0x3] %v416
        %p419 = scmp.lt.s32.totalorder %s20, 1
        %s420 = scalar_select %p419, %s20, 1
        %p421 = scmp.lt.s32.totalorder %s21, 0
        %s422 = scalar_select %p421, %s21, 0
        %s423 = smul.addr %s420, 4
        %s424 = sadd.s32 %s422, %s423
        %s425 = smul.addr %s424, 2
        %s426 = scalar_lea.vmem %s3, %s425
        // Predicated region
        $region41: #{_lambda_.1} parent=31 // pred_check
          %p427 = pneg %p118
        $region42: #{_lambda_.1} parent=31 // pred_check_branch
          %429 = sbr.rel (%p427) target = $region44
        $region43: #{_lambda_.1} parent=31 // pred_region
          _
        $region44: #{_lambda_.1} parent=31 // pred_fallthru
          _
      $region32: #{_lambda_.1} parent=5 // pred_fallthru
        _
      %p430 = scmp.le.s32.totalorder 2, %s11
      // Predicated region
      $region45: #{_lambda_.1} parent=5 // pred_check
        %p431 = pneg %p430
      $region46: #{_lambda_.1} parent=5 // pred_check_branch
        %433 = sbr.rel (%p431) target = $region48
      $region47: #{_lambda_.1} parent=5 // pred_region
        %s434 = ssub.s32 %s11, 2
        // Predicated region
        $region49: #{_lambda_.1} parent=47 // pred_check
          %p435 = pneg %p124
        $region50: #{_lambda_.1} parent=47 // pred_check_branch
          %437 = sbr.rel (%p435) target = $region52
        $region51: #{_lambda_.1} parent=47 // pred_region
          %p438 = scmp.lt.s32.totalorder %s22, 1
          %s439 = scalar_select %p438, %s22, 1
          %p440 = scmp.lt.s32.totalorder %s23, 0
          %s441 = scalar_select %p440, %s23, 0
          %s442 = smul.addr %s439, 4
          %s443 = sadd.s32 %s441, %s442
          %s444 = smul.addr %s443, 2
          %s445 = scalar_lea.vmem %s3, %s444
        $region52: #{_lambda_.1} parent=47 // pred_fallthru
          _
      $region48: #{_lambda_.1} parent=5 // pred_fallthru
        _
    $region6: #{_lambda_.1} parent=1 // loop_footer
      %s15 = sadd.s32 1, %s11
    $region7: #{_lambda_.1} parent=1 // loop_footer_branch
      %10 = sbr.rel target = $region3
    $region8: #{_lambda_.1} parent=1 // loop_exit
      _
    %446 = vsyncpa [#allocation3], 1
    %s447 = scalar_lea.sflag [#allocation3], 1
    %448 = vsyncpa %s447, 1
    %449 = vsyncpa [#allocation5], 1

</llo_original>
